<compile_context>
chip_gen: v6e
topology: v6e:2x2x1
jax: 0.10.0
libtpu: 0.0.40
codegen_flags: <defaults>
</compile_context>

<pallas_src>
import functools

import jax
import jax.numpy as jnp
from jax import lax
from jax.experimental import pallas as pl
from jax.experimental.pallas import tpu as pltpu


def _soft_ce_kernel(x_ref, tgt_ref, out_ref, acc_ref, *, smooth, n_total, tile_rows):
    # x_ref:   (TN, C) logits (native dtype) in VMEM
    # tgt_ref: (TN, 1) int32 class indices in VMEM
    # out_ref: (1, 1) float32 scalar loss in SMEM (written on last grid step only)
    # acc_ref: (1, 1) float32 running sum in SMEM scratch (persists across grid steps)
    i = pl.program_id(0)

    @pl.when(i == 0)
    def _():
        acc_ref[0, 0] = jnp.float32(0.0)

    x = x_ref[...].astype(jnp.float32)  # cast after load (halves HBM bytes for bf16 inputs)
    tn, c = x.shape

    # Mask rows that fall past the true batch size (padded last tile).
    row_ids = i * tile_rows + lax.broadcasted_iota(jnp.int32, (tn, 1), 0)
    row_valid = row_ids < n_total                      # (TN, 1) bool
    x = jnp.where(row_valid, x, jnp.float32(0.0))      # keep padded rows finite

    # Numerically stable log-softmax pieces over the class (lane) axis.
    m = jnp.max(x, axis=-1, keepdims=True)             # (TN, 1)
    shifted = x - m                                    # (TN, C)
    lse = jnp.log(jnp.sum(jnp.exp(shifted), axis=-1, keepdims=True))  # (TN, 1)

    # sum_c logprobs = sum_c shifted - C * lse   (per row, no (TN,C) logprobs temp needed)
    sum_shifted = jnp.sum(shifted, axis=-1, keepdims=True)            # (TN, 1)
    sum_logprobs = sum_shifted - jnp.float32(c) * lse                 # (TN, 1)

    # shifted value at the target class via a single masked reduce.
    class_ids = lax.broadcasted_iota(jnp.int32, (tn, c), 1)
    onehot = class_ids == tgt_ref[...]                                # (TN, C) bool
    tgt_shifted = jnp.sum(jnp.where(onehot, shifted, jnp.float32(0.0)),
                          axis=-1, keepdims=True)                     # (TN, 1)
    tgt_logprob = tgt_shifted - lse                                   # (TN, 1)

    off = jnp.float32(smooth / (c - 1))
    on_minus_off = jnp.float32((1.0 - smooth) - smooth / (c - 1))
    per_row = off * sum_logprobs + on_minus_off * tgt_logprob         # (TN, 1)
    partial = jnp.sum(jnp.where(row_valid, per_row, jnp.float32(0.0)))

    acc_ref[0, 0] += partial

    @pl.when(i == pl.num_programs(0) - 1)
    def _():
        # Negate and divide by the GLOBAL batch size exactly once.
        out_ref[0, 0] = -acc_ref[0, 0] * jnp.float32(1.0 / n_total)


def soft_ce(input_, target, smoothing=0.2):
    """input_: (N, C) float logits (any float dtype); target: (N,) int labels.

    Returns the scalar f32 label-smoothed cross-entropy loss.
    """
    n, c = input_.shape
    tgt = target.astype(jnp.int32).reshape(n, 1)

    # Rows per tile: big enough to amortize per-step overhead, small enough that the
    # double-buffered logits tile (2 * TN * C * itemsize) stays well inside scoped VMEM
    # on every generation (v5e 16 MiB default, v7x 64 MiB physical).
    itemsize = jnp.dtype(input_.dtype).itemsize
    budget_bytes = 8 * 1024 * 1024                      # per-input double-buffer budget
    tile_rows = max(8, budget_bytes // max(1, 2 * c * itemsize))
    tile_rows = min(tile_rows, n)
    if n >= 8:
        tile_rows = max(8, (tile_rows // 8) * 8)        # keep sublane multiple of 8
    num_tiles = pl.cdiv(n, tile_rows)

    kernel = functools.partial(
        _soft_ce_kernel,
        smooth=float(smoothing),
        n_total=n,
        tile_rows=tile_rows,
    )

    out = pl.pallas_call(
        kernel,
        out_shape=jax.ShapeDtypeStruct((1, 1), jnp.float32),
        grid_spec=pltpu.PrefetchScalarGridSpec(
            num_scalar_prefetch=0,
            grid=(num_tiles,),
            in_specs=[
                pl.BlockSpec((tile_rows, c), lambda i: (i, 0)),
                pl.BlockSpec((tile_rows, 1), lambda i: (i, 0)),
            ],
            out_specs=pl.BlockSpec(
                (1, 1), lambda i: (0, 0),
                memory_space=pltpu.MemorySpace.SMEM,
            ),
            scratch_shapes=[pltpu.SMEM((1, 1), jnp.float32)],
        ),
        compiler_params=pltpu.CompilerParams(
            # Single grid axis is the accumulation axis -> must stay "arbitrary".
            dimension_semantics=("arbitrary",),
            vmem_limit_bytes=64 * 1024 * 1024,
        ),
    )(input_, tgt)
    return out[0, 0]


def _soft_ce_ref(input_, target, smoothing=0.2):
    n, c = input_.shape
    onehot = jax.nn.one_hot(target, c, dtype=jnp.float32)
    smoothed = jnp.where(onehot == 1.0, 1.0 - smoothing, smoothing / (c - 1))
    logprobs = jax.nn.log_softmax(input_.astype(jnp.float32), axis=1)
    return -(smoothed * logprobs).sum() / n


if __name__ == "__main__":
    key = jax.random.PRNGKey(0)
    k_x, k_t = jax.random.split(key)

    # Small shapes consistent with the module: batch of 8 examples, 32 classes.
    N, C = 8, 32
    x = jax.random.normal(k_x, (N, C), dtype=jnp.float32)
    target = jax.random.randint(k_t, (N,), 0, C, dtype=jnp.int32)

    loss = soft_ce(x, target, smoothing=0.2)
    jax.block_until_ready(loss)
    ref = _soft_ce_ref(x, target, smoothing=0.2)
    assert jnp.allclose(loss, ref, rtol=1e-5, atol=1e-5), (loss, ref)

    # Also exercise the padded-last-tile (N % TN != 0) masking path.
    N2 = 13
    x2 = jax.random.normal(k_x, (N2, C), dtype=jnp.float32)
    t2 = jax.random.randint(k_t, (N2,), 0, C, dtype=jnp.int32)
    loss2 = soft_ce(x2, t2, smoothing=0.2)
    jax.block_until_ready(loss2)
    ref2 = _soft_ce_ref(x2, t2, smoothing=0.2)
    assert jnp.allclose(loss2, ref2, rtol=1e-5, atol=1e-5), (loss2, ref2)

    print("KERNEL_OK")
</pallas_src>

<mosaic_0001>
module attributes {stable_mosaic.version = 11 : i64} {
  func.func @_soft_ce_kernel(%arg0: i32, %arg1: memref<8x32xf32, #tpu.memory_space<vmem>>, %arg2: memref<8x1xi32, #tpu.memory_space<vmem>>, %arg3: memref<1x1xf32, #tpu.memory_space<smem>>, %arg4: memref<1x1xf32, #tpu.memory_space<smem>>) attributes {dimension_semantics = [#tpu.dimension_semantics<arbitrary>], iteration_bounds = array<i64: 1>, scalar_prefetch = 0 : i64, scratch_operands = 1 : i64, tpu.core_type = #tpu.core_type<tc>, window_params = [{transform_indices = @transform_0, window_bounds = array<i64: 8, 32>}, {transform_indices = @transform_1, window_bounds = array<i64: 8, 1>}, {transform_indices = @transform_2, window_bounds = array<i64: 1, 1>}]} {
    %c0_i32 = arith.constant 0 : i32
    %0 = arith.cmpi eq, %arg0, %c0_i32 : i32
    %1 = arith.extui %0 : i1 to i32
    %c0_i32_0 = arith.constant 0 : i32
    %2 = arith.cmpi ne, %1, %c0_i32_0 : i32
    scf.if %2 {
      %cst_21 = arith.constant 0.000000e+00 : f32
      %c0_22 = arith.constant 0 : index
      %c0_23 = arith.constant 0 : index
      %53 = memref.load %arg4[%c0_22, %c0_23] : memref<1x1xf32, #tpu.memory_space<smem>>
      memref.store %cst_21, %arg4[%c0_22, %c0_23] : memref<1x1xf32, #tpu.memory_space<smem>>
    } else {
    }
    %c0 = arith.constant 0 : index
    %c0_1 = arith.constant 0 : index
    %3 = vector.load %arg1[%c0, %c0_1] : memref<8x32xf32, #tpu.memory_space<vmem>>, vector<8x32xf32>
    %c8_i32 = arith.constant 8 : i32
    %4 = arith.muli %arg0, %c8_i32 : i32
    %5 = tpu.iota {dimensions = array<i32: 0>} : vector<8x1xi32>
    %6 = vector.broadcast %4 : i32 to vector<8x1xi32>
    %7 = arith.addi %6, %5 : vector<8x1xi32>
    %c8_i32_2 = arith.constant 8 : i32
    %8 = vector.broadcast %c8_i32_2 : i32 to vector<8x1xi32>
    %9 = arith.cmpi slt, %7, %8 : vector<8x1xi32>
    %cst = arith.constant 0.000000e+00 : f32
    %10 = vector.shape_cast %9 : vector<8x1xi1> to vector<8x1xi1>
    %11 = vector.broadcast %10 : vector<8x1xi1> to vector<8x32xi1>
    %12 = vector.broadcast %cst : f32 to vector<8x32xf32>
    %13 = arith.select %11, %3, %12 : vector<8x32xi1>, vector<8x32xf32>
    %cst_3 = arith.constant dense<0xFF800000> : vector<8xf32>
    %14 = vector.multi_reduction <maximumf>, %13, %cst_3 [1] : vector<8x32xf32> to vector<8xf32>
    %15 = vector.shape_cast %14 : vector<8xf32> to vector<8x1xf32>
    %16 = vector.broadcast %15 : vector<8x1xf32> to vector<8x32xf32>
    %17 = arith.subf %13, %16 : vector<8x32xf32>
    %18 = math.exp %17 : vector<8x32xf32>
    %cst_4 = arith.constant dense<0.000000e+00> : vector<8xf32>
    %19 = vector.multi_reduction <add>, %18, %cst_4 [1] : vector<8x32xf32> to vector<8xf32>
    %20 = vector.shape_cast %19 : vector<8xf32> to vector<8x1xf32>
    %21 = math.log %20 : vector<8x1xf32>
    %cst_5 = arith.constant dense<0.000000e+00> : vector<8xf32>
    %22 = vector.multi_reduction <add>, %17, %cst_5 [1] : vector<8x32xf32> to vector<8xf32>
    %23 = vector.shape_cast %22 : vector<8xf32> to vector<8x1xf32>
    %cst_6 = arith.constant 3.200000e+01 : f32
    %24 = vector.broadcast %cst_6 : f32 to vector<8x1xf32>
    %25 = arith.mulf %24, %21 : vector<8x1xf32>
    %26 = arith.subf %23, %25 : vector<8x1xf32>
    %27 = tpu.iota {dimensions = array<i32: 1>} : vector<8x32xi32>
    %c0_7 = arith.constant 0 : index
    %c0_8 = arith.constant 0 : index
    %28 = vector.load %arg2[%c0_7, %c0_8] : memref<8x1xi32, #tpu.memory_space<vmem>>, vector<8x1xi32>
    %29 = vector.broadcast %28 : vector<8x1xi32> to vector<8x32xi32>
    %30 = arith.cmpi eq, %27, %29 : vector<8x32xi32>
    %cst_9 = arith.constant 0.000000e+00 : f32
    %31 = vector.broadcast %cst_9 : f32 to vector<8x32xf32>
    %32 = arith.select %30, %17, %31 : vector<8x32xi1>, vector<8x32xf32>
    %cst_10 = arith.constant dense<0.000000e+00> : vector<8xf32>
    %33 = vector.multi_reduction <add>, %32, %cst_10 [1] : vector<8x32xf32> to vector<8xf32>
    %34 = vector.shape_cast %33 : vector<8xf32> to vector<8x1xf32>
    %35 = arith.subf %34, %21 : vector<8x1xf32>
    %cst_11 = arith.constant 0.0064516128 : f32
    %36 = vector.broadcast %cst_11 : f32 to vector<8x1xf32>
    %37 = arith.mulf %36, %26 : vector<8x1xf32>
    %cst_12 = arith.constant 0.793548405 : f32
    %38 = vector.broadcast %cst_12 : f32 to vector<8x1xf32>
    %39 = arith.mulf %38, %35 : vector<8x1xf32>
    %40 = arith.addf %37, %39 : vector<8x1xf32>
    %cst_13 = arith.constant 0.000000e+00 : f32
    %41 = vector.broadcast %cst_13 : f32 to vector<8x1xf32>
    %42 = arith.select %9, %40, %41 : vector<8x1xi1>, vector<8x1xf32>
    %43 = vector.shape_cast %42 : vector<8x1xf32> to vector<1x8x1xf32>
    %cst_14 = arith.constant dense<0.000000e+00> : vector<1xf32>
    %44 = vector.multi_reduction <add>, %43, %cst_14 [1, 2] : vector<1x8x1xf32> to vector<1xf32>
    %45 = vector.shape_cast %44 : vector<1xf32> to vector<1x1x1xf32>
    %46 = vector.extract %45[0, 0, 0] : f32 from vector<1x1x1xf32>
    %c0_15 = arith.constant 0 : index
    %c0_16 = arith.constant 0 : index
    %47 = memref.load %arg4[%c0_15, %c0_16] : memref<1x1xf32, #tpu.memory_space<smem>>
    %48 = arith.addf %47, %46 : f32
    %c0_17 = arith.constant 0 : index
    %c0_18 = arith.constant 0 : index
    %49 = memref.load %arg4[%c0_17, %c0_18] : memref<1x1xf32, #tpu.memory_space<smem>>
    memref.store %48, %arg4[%c0_17, %c0_18] : memref<1x1xf32, #tpu.memory_space<smem>>
    %c0_i32_19 = arith.constant 0 : i32
    %50 = arith.cmpi eq, %arg0, %c0_i32_19 : i32
    %51 = arith.extui %50 : i1 to i32
    %c0_i32_20 = arith.constant 0 : i32
    %52 = arith.cmpi ne, %51, %c0_i32_20 : i32
    scf.if %52 {
      %c0_21 = arith.constant 0 : index
      %c0_22 = arith.constant 0 : index
      %53 = memref.load %arg4[%c0_21, %c0_22] : memref<1x1xf32, #tpu.memory_space<smem>>
      %cst_23 = arith.constant 0.000000e+00 : f32
      %54 = arith.subf %cst_23, %53 : f32
      %cst_24 = arith.constant 1.250000e-01 : f32
      %55 = arith.mulf %54, %cst_24 : f32
      %c0_25 = arith.constant 0 : index
      %c0_26 = arith.constant 0 : index
      %56 = memref.load %arg3[%c0_25, %c0_26] : memref<1x1xf32, #tpu.memory_space<smem>>
      memref.store %55, %arg3[%c0_25, %c0_26] : memref<1x1xf32, #tpu.memory_space<smem>>
    } else {
    }
    return
  }
  func.func @transform_0(%arg0: i32) -> (i32, i32) {
    %c0_i32 = arith.constant 0 : i32
    %c0_i32_0 = arith.constant 0 : i32
    return %arg0, %c0_i32 : i32, i32
  }
  func.func @transform_1(%arg0: i32) -> (i32, i32) {
    %c0_i32 = arith.constant 0 : i32
    %c0_i32_0 = arith.constant 0 : i32
    return %arg0, %c0_i32 : i32, i32
  }
  func.func @transform_2(%arg0: i32) -> (i32, i32) {
    %c0_i32 = arith.constant 0 : i32
    %c0_i32_0 = arith.constant 0 : i32
    %c0_i32_1 = arith.constant 0 : i32
    return %c0_i32, %c0_i32_0 : i32, i32
  }
}

</mosaic_0001>

<llo_original>
// kernel: tpu_custom_call.1
$region0: #{tpu_custom_call.1}
  #allocation0 [shape = 'u32[]', space=smem, size = 0x4, offset = 0x4, fixed_abs, tag = 'smem constant byte address 0x4 - core index']
  #allocation1 [shape = 'u32[144,128]{1,0:T(1,128)}', space=vmem, size = 0x12000, scoped, tag = 'internal scratch']
  #allocation2 [shape = 'f32[1,1]{1,0:T(1,128)}', space=smem, size = 0x200, scoped, tag = 'scratch operand']
  %s0 = inlined_call_operand.vmem [shape: f32[8,32], index: 0, kind: input, shape index: {}]
  %s1 = inlined_call_operand.vmem [shape: s32[8,1], index: 1, kind: input, shape index: {}]
  %s2 = inlined_call_operand.hbm [shape: f32[1,1], index: 2, kind: output, shape index: {}]
  %s3 = sld [smem:[#allocation0]]
  $region26: #{tpu_custom_call.1} parent=0
    _
  %s5 = ssub.s32 1, %s3
  %s6 = scalar_select 0, %s5, %s3
  $region1: #{tpu_custom_call.1} parent=0
    #allocation3 [shape = 'u8[512]{0}', space=smem, size = 0x200, scoped, tag = 'output window, operand 0, single buffered']
    #allocation4 [shape = 's32[1]{0}', space=sflag, size = 0x4, scoped, tag = 'scoped memory for tpu_custom_call.1']
    %7 = vsyncpa [#allocation4], 0
    // Predicated region
    $region2: #{tpu_custom_call.1} parent=1 // pred_check
      _
    $region3: #{tpu_custom_call.1} parent=1 // pred_check_branch
      %9 = sbr.rel (0) target = $region5
    $region4: #{tpu_custom_call.1} parent=1 // pred_region
      _
    $region5: #{tpu_custom_call.1} parent=1 // pred_fallthru
      _
    // Predicated region
    $region6: #{tpu_custom_call.1} parent=1 // pred_check
      _
    $region7: #{tpu_custom_call.1} parent=1 // pred_check_branch
      %11 = sbr.rel (0) target = $region9
    $region8: #{tpu_custom_call.1} parent=1 // pred_region
      _
    $region9: #{tpu_custom_call.1} parent=1 // pred_fallthru
      _
    %p12 = scmp.eq.s32.totalorder 0, 0
    // Predicated region
    $region10: #{tpu_custom_call.1} parent=1 // pred_check
      %p13 = pneg %p12
    $region11: #{tpu_custom_call.1} parent=1 // pred_check_branch
      %15 = sbr.rel (%p13) target = $region13
    $region12: #{tpu_custom_call.1} parent=1 // pred_region
      %s16 = scalar_lea.smem [#allocation2], 0
      %17 = sst [smem:[%s16]] 0.0
    $region13: #{tpu_custom_call.1} parent=1 // pred_fallthru
      _
    %v18 = vld [vmem:[%s0] sm:$0xff]
    %s19 = smul.u32 0, 8
    %v20 = vlaneseq
    %v21 = vshrl.u32 %v20, 7
    %v22 = vstv %s19
    %v23 = vadd.s32 %v22, %v21
    %vm24 = vcmp.lt.s32.totalorder %v23, 8
    %v25 = vsel %vm24, 1, 0
    %vm26 = vcmp.eq.s32.totalorder %v25, 1
    %v27 = vsel %vm26, %v18, 0.0
    %vm28 = vcmask 261120
    %v29 = vsel %vm28, %v27, -inf
    %30 = vmax.xlane.f32.xlu0 %v29
    %v31 = vpop.xlane.xlu0 %30
    %v32 = vsub.f32 %v27, %v31
    %v33 = vmul.f32 %v32, 1.442695
    %v34 = vpow.pop %v33
    %v35 = vsel %vm28, %v34, 0.0
    %36 = vadd.xlane.f32.xlu0 %v35
    %v37 = vpop.xlane.xlu0 %36
    %v38 = vlog2.pop %v37
    %v39 = vmul.f32 %v38, 0.6931472
    %v40 = vsel %vm28, %v32, 0.0
    %41 = vadd.xlane.f32.xlu0 %v40
    %v42 = vpop.xlane.xlu0 %41
    %v43 = vmul.f32 %v39, 32.0
    %v44 = vsub.f32 %v42, %v43
    %v45 = vlaneseq
    %v46 = vand.u32 %v45, 127
    %v47 = vld [vmem:[%s1] sm:$0xff]
    %48 = vset.pattern.permute.xlu0 0
    %49 = vperm.xlu0 %48, %v47
    %v50 = vpop.permute.xlu0 %49
    %vm51 = vcmp.eq.s32.totalorder %v46, %v50
    %v52 = vsel %vm51, %v32, 0.0
    %v53 = vsel %vm28, %v52, 0.0
    %54 = vadd.xlane.f32.xlu0 %v53
    %v55 = vpop.xlane.xlu0 %54
    %v56 = vsub.f32 %v55, %v39
    %v57 = vmul.f32 %v44, 0.006451613
    %v58 = vmul.f32 %v56, 0.7935484
    %v59 = vadd.f32 %v57, %v58
    %v60 = vsel %vm24, %v59, 0.0
    %vm61 = vcmask 7168
    %v62 = vsel %vm61, %v60, 0.0
    %63 = vadd.xlane.f32.xlu0 %v62
    %v64 = vpop.xlane.xlu0 %63
    %v65 = vrot.slane %v64, 4
    %v66 = vadd.f32 %v64, %v65
    %v67 = vrot.slane %v66, 2
    %v68 = vadd.f32 %v66, %v67
    %v69 = vrot.slane %v68, 1
    %v70 = vadd.f32 %v68, %v69
    %s71 = vtos %v70
    %s72 = sld [smem:[#allocation2]]
    %s73 = sadd.f32 %s72, %s71
    %s74 = scalar_lea.smem [#allocation2], 0
    %75 = sst [smem:[%s74]] %s73
    // Predicated region
    $region14: #{tpu_custom_call.1} parent=1 // pred_check
      %p76 = pneg %p12
    $region15: #{tpu_custom_call.1} parent=1 // pred_check_branch
      %78 = sbr.rel (%p76) target = $region17
    $region16: #{tpu_custom_call.1} parent=1 // pred_region
      %s79 = sld [smem:[#allocation2]]
      %s80 = ssub.f32 0.0, %s79
      %s81 = smul.f32 %s80, 0.125
      %s82 = scalar_lea.smem [#allocation3], 0
      %83 = sst [smem:[%s82]] %s81
    $region17: #{tpu_custom_call.1} parent=1 // pred_fallthru
      _
    // Predicated region
    $region18: #{tpu_custom_call.1} parent=1 // pred_check
      _
    $region19: #{tpu_custom_call.1} parent=1 // pred_check_branch
      %85 = sbr.rel (0) target = $region21
    $region20: #{tpu_custom_call.1} parent=1 // pred_region
      %s87 = ssub.s32 16, 16
      %88 = vsyncadd [#allocation4], %s87
      %91 = dma.smem_to_hbm [#allocation3], 16, %s2, [#allocation4]
    $region21: #{tpu_custom_call.1} parent=1 // pred_fallthru
      _
    // Predicated region
    $region22: #{tpu_custom_call.1} parent=1 // pred_check
      _
    $region23: #{tpu_custom_call.1} parent=1 // pred_check_branch
      %93 = sbr.rel (0) target = $region25
    $region24: #{tpu_custom_call.1} parent=1 // pred_region
      %94 = dma.done [#allocation4], 16
    $region25: #{tpu_custom_call.1} parent=1 // pred_fallthru
      _
    %95 = sfence
    %96 = vsyncpa [#allocation4], 1

</llo_original>
